<compile_context>
chip_gen: v7x
topology: tpu7x:2x2x1
jax: 0.10.0
libtpu: 0.0.40
codegen_flags: <defaults>
</compile_context>

<pallas_src>
import jax
import jax.numpy as jnp
from jax.experimental import pallas as pl
from jax.experimental.pallas import tpu as pltpu

FEATURES = 10
UNITS = 96
UNITS_PAD = 128           # hidden width padded to one full 128-lane vreg
DEFAULT_BLOCK_B = 8192    # max batch tile (rows); large to amortize per-step overhead
MIN_SPLIT_ROWS = 2048     # rows per core below which splitting the grid isn't worth it


def _round_up(n, m):
    return ((n + m - 1) // m) * m


def _cdiv(a, b):
    return (a + b - 1) // b


def mlp_kernel(x_ref, w0_ref, b0_ref, w1_ref, b1_ref,
               w2_ref, b2_ref, w3_ref, b3_ref, o_ref):
    # fc0: MXU (bf16 operands, f32 accumulate); bias + ReLU in bf16.
    h = jnp.dot(x_ref[...].astype(jnp.bfloat16), w0_ref[...],
                preferred_element_type=jnp.float32)
    h = jnp.maximum(h.astype(jnp.bfloat16) + b0_ref[...], 0)
    # drop (identity in eval)
    # fc1
    h = jnp.dot(h, w1_ref[...], preferred_element_type=jnp.float32)
    h = jnp.maximum(h.astype(jnp.bfloat16) + b1_ref[...], 0)
    # drop (identity in eval)
    # fc2
    h = jnp.dot(h, w2_ref[...], preferred_element_type=jnp.float32)
    h = jnp.maximum(h.astype(jnp.bfloat16) + b2_ref[...], 0)
    # drop (identity in eval)
    # fc3 (N=1): off the MXU.  VPU broadcast-multiply against the (1,128) w3 row,
    # XLU lane reduction, all accumulated in f32.  Padded lanes of w3 are zero.
    out = jnp.sum(h.astype(jnp.float32) * w3_ref[...], axis=-1, keepdims=True)
    o_ref[...] = (out + b3_ref[...]).astype(o_ref.dtype)


def net_forward(x, params, *, block_b=DEFAULT_BLOCK_B):
    """x: (B, FEATURES) float32 (or bfloat16). params: dict from prepare_params()."""
    B = x.shape[0]

    # Pad the batch only to a multiple of 16 rows (clean bf16 sublane packing);
    # never pad all the way up to a block_b multiple.
    B16 = _round_up(max(B, 16), 16)
    n_steps = _cdiv(B16, block_b)
    # v7x megacore: use both TensorCores once there is enough work per core, and keep
    # the number of grid steps even so the cores stay load-balanced.
    if n_steps < 2 and B16 >= 2 * MIN_SPLIT_ROWS:
        n_steps = 2
    if n_steps > 1 and n_steps % 2 == 1:
        n_steps += 1
    TB = _round_up(_cdiv(B16, n_steps), 16)
    B_pad = TB * n_steps

    if B_pad != B:
        x = jnp.pad(x, ((0, B_pad - B), (0, 0)))

    def resident(arr):
        # Whole array, same block every grid step -> stays resident in VMEM.
        return pl.BlockSpec(arr.shape, lambda i: (0, 0))

    w0, b0 = params["w0"], params["b0"]
    w1, b1 = params["w1"], params["b1"]
    w2, b2 = params["w2"], params["b2"]
    w3, b3 = params["w3"], params["b3"]

    out = pl.pallas_call(
        mlp_kernel,
        out_shape=jax.ShapeDtypeStruct((B_pad, 1), jnp.float32),
        grid=(n_steps,),
        in_specs=[
            pl.BlockSpec((TB, FEATURES), lambda i: (i, 0)),   # x tile (pipelined)
            resident(w0), resident(b0),
            resident(w1), resident(b1),
            resident(w2), resident(b2),
            resident(w3), resident(b3),
        ],
        out_specs=pl.BlockSpec((TB, 1), lambda i: (i, 0)),
        compiler_params=pltpu.CompilerParams(
            dimension_semantics=("parallel",),
            vmem_limit_bytes=32 * 1024 * 1024,
        ),
    )(x, w0, b0, w1, b1, w2, b2, w3, b3)
    return out[:B]


def init_params(key):
    """PyTorch-like nn.Linear init (U(-1/sqrt(fan_in), +1/sqrt(fan_in))).
    Weights stored transposed to (in, out); biases as (1, out)."""
    def linear(key, fan_in, fan_out):
        kw, kb = jax.random.split(key)
        bound = 1.0 / jnp.sqrt(fan_in)
        w = jax.random.uniform(kw, (fan_in, fan_out), jnp.float32, -bound, bound)
        b = jax.random.uniform(kb, (1, fan_out), jnp.float32, -bound, bound)
        return w, b

    k0, k1, k2, k3 = jax.random.split(key, 4)
    w0, b0 = linear(k0, FEATURES, UNITS)
    w1, b1 = linear(k1, UNITS, UNITS)
    w2, b2 = linear(k2, UNITS, UNITS)
    w3, b3 = linear(k3, UNITS, 1)
    return {"w0": w0, "b0": b0, "w1": w1, "b1": b1,
            "w2": w2, "b2": b2, "w3": w3, "b3": b3}


def prepare_params(raw):
    """Zero-pad hidden width 96 -> 128, cast weights AND hidden biases to bf16,
    and store w3 as an f32 (1, 128) row (fc3 runs on the VPU/XLU, not the MXU)."""
    pad_out = UNITS_PAD - UNITS

    def pad2(a, rows, cols):
        return jnp.pad(a, ((0, rows), (0, cols)))

    w0 = pad2(raw["w0"], 0, pad_out).astype(jnp.bfloat16)          # (10, 128)
    b0 = pad2(raw["b0"], 0, pad_out).astype(jnp.bfloat16)          # (1, 128), pad lanes = 0
    w1 = pad2(raw["w1"], pad_out, pad_out).astype(jnp.bfloat16)    # (128, 128)
    b1 = pad2(raw["b1"], 0, pad_out).astype(jnp.bfloat16)
    w2 = pad2(raw["w2"], pad_out, pad_out).astype(jnp.bfloat16)    # (128, 128)
    b2 = pad2(raw["b2"], 0, pad_out).astype(jnp.bfloat16)
    w3 = pad2(raw["w3"], pad_out, 0).T                              # (1, 128) f32, pad lanes = 0
    b3 = raw["b3"]                                                  # (1, 1) f32
    return {"w0": w0, "b0": b0, "w1": w1, "b1": b1,
            "w2": w2, "b2": b2, "w3": w3, "b3": b3}


def ref_forward(x, params):
    """Pure-JAX reference with numerics matching the kernel
    (bf16 matmul operands + f32 accumulation, bf16 bias/ReLU, f32 fc3 reduction)."""
    def dot(a, w):
        return jnp.dot(a.astype(jnp.bfloat16), w, preferred_element_type=jnp.float32)

    h = jnp.maximum(dot(x, params["w0"]).astype(jnp.bfloat16) + params["b0"], 0)
    h = jnp.maximum(dot(h, params["w1"]).astype(jnp.bfloat16) + params["b1"], 0)
    h = jnp.maximum(dot(h, params["w2"]).astype(jnp.bfloat16) + params["b2"], 0)
    out = jnp.sum(h.astype(jnp.float32) * params["w3"], axis=-1, keepdims=True)
    return out + params["b3"]


if __name__ == "__main__":
    key = jax.random.PRNGKey(0)
    kx, kx2, kp = jax.random.split(key, 3)

    params = prepare_params(init_params(kp))

    # Small batch (single grid step, minimal 16-row padding).
    B = 8
    x = jax.random.normal(kx, (B, FEATURES), dtype=jnp.float32)
    out = net_forward(x, params)
    jax.block_until_ready(out)
    ref = ref_forward(x, params)
    assert out.shape == (B, 1)
    assert jnp.allclose(out, ref, atol=2e-3, rtol=2e-3)

    # Larger batch with a remainder: exercises the multi-step grid + even-split padding path.
    B2 = 1030
    x2 = jax.random.normal(kx2, (B2, FEATURES), dtype=jnp.float32)
    out2 = net_forward(x2, params, block_b=512)
    jax.block_until_ready(out2)
    ref2 = ref_forward(x2, params)
    assert out2.shape == (B2, 1)
    assert jnp.allclose(out2, ref2, atol=2e-3, rtol=2e-3)

    print("KERNEL_OK")
</pallas_src>

<mosaic_0001>
module attributes {stable_mosaic.version = 11 : i64} {
  func.func @mlp_kernel(%arg0: i32, %arg1: memref<16x10xf32, #tpu.memory_space<vmem>>, %arg2: memref<10x128xbf16, #tpu.memory_space<vmem>>, %arg3: memref<1x128xbf16, #tpu.memory_space<vmem>>, %arg4: memref<128x128xbf16, #tpu.memory_space<vmem>>, %arg5: memref<1x128xbf16, #tpu.memory_space<vmem>>, %arg6: memref<128x128xbf16, #tpu.memory_space<vmem>>, %arg7: memref<1x128xbf16, #tpu.memory_space<vmem>>, %arg8: memref<1x128xf32, #tpu.memory_space<vmem>>, %arg9: memref<1x1xf32, #tpu.memory_space<vmem>>, %arg10: memref<16x1xf32, #tpu.memory_space<vmem>>) attributes {dimension_semantics = [#tpu.dimension_semantics<parallel>], iteration_bounds = array<i64: 1>, scalar_prefetch = 0 : i64, scratch_operands = 0 : i64, tpu.core_type = #tpu.core_type<tc>, window_params = [{transform_indices = @transform_0, window_bounds = array<i64: 16, 10>}, {pipeline_mode = #tpu.pipeline_mode<synchronous>, transform_indices = @transform_1, window_bounds = array<i64: 10, 128>}, {pipeline_mode = #tpu.pipeline_mode<synchronous>, transform_indices = @transform_2, window_bounds = array<i64: 1, 128>}, {pipeline_mode = #tpu.pipeline_mode<synchronous>, transform_indices = @transform_3, window_bounds = array<i64: 128, 128>}, {pipeline_mode = #tpu.pipeline_mode<synchronous>, transform_indices = @transform_4, window_bounds = array<i64: 1, 128>}, {pipeline_mode = #tpu.pipeline_mode<synchronous>, transform_indices = @transform_5, window_bounds = array<i64: 128, 128>}, {pipeline_mode = #tpu.pipeline_mode<synchronous>, transform_indices = @transform_6, window_bounds = array<i64: 1, 128>}, {pipeline_mode = #tpu.pipeline_mode<synchronous>, transform_indices = @transform_7, window_bounds = array<i64: 1, 128>}, {pipeline_mode = #tpu.pipeline_mode<synchronous>, transform_indices = @transform_8, window_bounds = array<i64: 1, 1>}, {transform_indices = @transform_9, window_bounds = array<i64: 16, 1>}]} {
    %c0 = arith.constant 0 : index
    %c0_0 = arith.constant 0 : index
    %0 = vector.load %arg1[%c0, %c0_0] : memref<16x10xf32, #tpu.memory_space<vmem>>, vector<16x10xf32>
    %1 = arith.truncf %0 : vector<16x10xf32> to vector<16x10xbf16>
    %c0_1 = arith.constant 0 : index
    %c0_2 = arith.constant 0 : index
    %2 = vector.load %arg2[%c0_1, %c0_2] : memref<10x128xbf16, #tpu.memory_space<vmem>>, vector<10x128xbf16>
    %cst = arith.constant dense<0.000000e+00> : vector<16x128xf32>
    %3 = tpu.matmul %1, %2, %cst {dimension_numbers = #tpu.dot_dimension_numbers<[1], [0], [0], [1], [0, 0, 1, 1], [], []>} : vector<16x10xbf16>, vector<10x128xbf16>, vector<16x128xf32> -> vector<16x128xf32>
    %4 = arith.truncf %3 : vector<16x128xf32> to vector<16x128xbf16>
    %c0_3 = arith.constant 0 : index
    %c0_4 = arith.constant 0 : index
    %5 = vector.load %arg3[%c0_3, %c0_4] : memref<1x128xbf16, #tpu.memory_space<vmem>>, vector<1x128xbf16>
    %6 = vector.broadcast %5 : vector<1x128xbf16> to vector<16x128xbf16>
    %7 = arith.addf %4, %6 : vector<16x128xbf16>
    %cst_5 = arith.constant 0.000000e+00 : bf16
    %8 = vector.broadcast %cst_5 : bf16 to vector<16x128xbf16>
    %9 = arith.maximumf %7, %8 : vector<16x128xbf16>
    %c0_6 = arith.constant 0 : index
    %c0_7 = arith.constant 0 : index
    %10 = vector.load %arg4[%c0_6, %c0_7] : memref<128x128xbf16, #tpu.memory_space<vmem>>, vector<128x128xbf16>
    %cst_8 = arith.constant dense<0.000000e+00> : vector<16x128xf32>
    %11 = tpu.matmul %9, %10, %cst_8 {dimension_numbers = #tpu.dot_dimension_numbers<[1], [0], [0], [1], [0, 0, 1, 1], [], []>} : vector<16x128xbf16>, vector<128x128xbf16>, vector<16x128xf32> -> vector<16x128xf32>
    %12 = arith.truncf %11 : vector<16x128xf32> to vector<16x128xbf16>
    %c0_9 = arith.constant 0 : index
    %c0_10 = arith.constant 0 : index
    %13 = vector.load %arg5[%c0_9, %c0_10] : memref<1x128xbf16, #tpu.memory_space<vmem>>, vector<1x128xbf16>
    %14 = vector.broadcast %13 : vector<1x128xbf16> to vector<16x128xbf16>
    %15 = arith.addf %12, %14 : vector<16x128xbf16>
    %cst_11 = arith.constant 0.000000e+00 : bf16
    %16 = vector.broadcast %cst_11 : bf16 to vector<16x128xbf16>
    %17 = arith.maximumf %15, %16 : vector<16x128xbf16>
    %c0_12 = arith.constant 0 : index
    %c0_13 = arith.constant 0 : index
    %18 = vector.load %arg6[%c0_12, %c0_13] : memref<128x128xbf16, #tpu.memory_space<vmem>>, vector<128x128xbf16>
    %cst_14 = arith.constant dense<0.000000e+00> : vector<16x128xf32>
    %19 = tpu.matmul %17, %18, %cst_14 {dimension_numbers = #tpu.dot_dimension_numbers<[1], [0], [0], [1], [0, 0, 1, 1], [], []>} : vector<16x128xbf16>, vector<128x128xbf16>, vector<16x128xf32> -> vector<16x128xf32>
    %20 = arith.truncf %19 : vector<16x128xf32> to vector<16x128xbf16>
    %c0_15 = arith.constant 0 : index
    %c0_16 = arith.constant 0 : index
    %21 = vector.load %arg7[%c0_15, %c0_16] : memref<1x128xbf16, #tpu.memory_space<vmem>>, vector<1x128xbf16>
    %22 = vector.broadcast %21 : vector<1x128xbf16> to vector<16x128xbf16>
    %23 = arith.addf %20, %22 : vector<16x128xbf16>
    %cst_17 = arith.constant 0.000000e+00 : bf16
    %24 = vector.broadcast %cst_17 : bf16 to vector<16x128xbf16>
    %25 = arith.maximumf %23, %24 : vector<16x128xbf16>
    %26 = arith.extf %25 : vector<16x128xbf16> to vector<16x128xf32>
    %c0_18 = arith.constant 0 : index
    %c0_19 = arith.constant 0 : index
    %27 = vector.load %arg8[%c0_18, %c0_19] : memref<1x128xf32, #tpu.memory_space<vmem>>, vector<1x128xf32>
    %28 = vector.broadcast %27 : vector<1x128xf32> to vector<16x128xf32>
    %29 = arith.mulf %26, %28 : vector<16x128xf32>
    %cst_20 = arith.constant dense<0.000000e+00> : vector<16xf32>
    %30 = vector.multi_reduction <add>, %29, %cst_20 [1] : vector<16x128xf32> to vector<16xf32>
    %31 = vector.shape_cast %30 : vector<16xf32> to vector<16x1xf32>
    %c0_21 = arith.constant 0 : index
    %c0_22 = arith.constant 0 : index
    %32 = vector.load %arg9[%c0_21, %c0_22] : memref<1x1xf32, #tpu.memory_space<vmem>>, vector<1x1xf32>
    %33 = vector.broadcast %32 : vector<1x1xf32> to vector<16x1xf32>
    %34 = arith.addf %31, %33 : vector<16x1xf32>
    %c0_23 = arith.constant 0 : index
    %c0_24 = arith.constant 0 : index
    %35 = vector.load %arg10[%c0_23, %c0_24] : memref<16x1xf32, #tpu.memory_space<vmem>>, vector<16x1xf32>
    tpu.vector_store %arg10[%c0_23, %c0_24], %34 {strides = array<i32>} : memref<16x1xf32, #tpu.memory_space<vmem>>, vector<16x1xf32>,
    return
  }
  func.func @transform_0(%arg0: i32) -> (i32, i32) {
    %c0_i32 = arith.constant 0 : i32
    %c0_i32_0 = arith.constant 0 : i32
    return %arg0, %c0_i32 : i32, i32
  }
  func.func @transform_1(%arg0: i32) -> (i32, i32) {
    %c0_i32 = arith.constant 0 : i32
    %c0_i32_0 = arith.constant 0 : i32
    %c0_i32_1 = arith.constant 0 : i32
    return %c0_i32, %c0_i32_0 : i32, i32
  }
  func.func @transform_2(%arg0: i32) -> (i32, i32) {
    %c0_i32 = arith.constant 0 : i32
    %c0_i32_0 = arith.constant 0 : i32
    %c0_i32_1 = arith.constant 0 : i32
    return %c0_i32, %c0_i32_0 : i32, i32
  }
  func.func @transform_3(%arg0: i32) -> (i32, i32) {
    %c0_i32 = arith.constant 0 : i32
    %c0_i32_0 = arith.constant 0 : i32
    %c0_i32_1 = arith.constant 0 : i32
    return %c0_i32, %c0_i32_0 : i32, i32
  }
  func.func @transform_4(%arg0: i32) -> (i32, i32) {
    %c0_i32 = arith.constant 0 : i32
    %c0_i32_0 = arith.constant 0 : i32
    %c0_i32_1 = arith.constant 0 : i32
    return %c0_i32, %c0_i32_0 : i32, i32
  }
  func.func @transform_5(%arg0: i32) -> (i32, i32) {
    %c0_i32 = arith.constant 0 : i32
    %c0_i32_0 = arith.constant 0 : i32
    %c0_i32_1 = arith.constant 0 : i32
    return %c0_i32, %c0_i32_0 : i32, i32
  }
  func.func @transform_6(%arg0: i32) -> (i32, i32) {
    %c0_i32 = arith.constant 0 : i32
    %c0_i32_0 = arith.constant 0 : i32
    %c0_i32_1 = arith.constant 0 : i32
    return %c0_i32, %c0_i32_0 : i32, i32
  }
  func.func @transform_7(%arg0: i32) -> (i32, i32) {
    %c0_i32 = arith.constant 0 : i32
    %c0_i32_0 = arith.constant 0 : i32
    %c0_i32_1 = arith.constant 0 : i32
    return %c0_i32, %c0_i32_0 : i32, i32
  }
  func.func @transform_8(%arg0: i32) -> (i32, i32) {
    %c0_i32 = arith.constant 0 : i32
    %c0_i32_0 = arith.constant 0 : i32
    %c0_i32_1 = arith.constant 0 : i32
    return %c0_i32, %c0_i32_0 : i32, i32
  }
  func.func @transform_9(%arg0: i32) -> (i32, i32) {
    %c0_i32 = arith.constant 0 : i32
    %c0_i32_0 = arith.constant 0 : i32
    return %arg0, %c0_i32 : i32, i32
  }
}

</mosaic_0001>

<llo_original>
// kernel: tpu_custom_call.1
$region0: #{tpu_custom_call.1}
  #allocation0 [shape = 'u32[]', space=smem, size = 0x4, offset = 0x4, fixed_abs, tag = 'smem constant byte address 0x4 - core index']
  #allocation1 [shape = 'u32[144,128]{1,0:T(1,128)}', space=vmem, size = 0x12000, scoped, tag = 'internal scratch']
  #allocation2 [shape = 'f32[1,1]{1,0:T(1,128)S(1)}', space=vmem, size = 0x200, scoped, tag = 'scoped memory for tpu_custom_call.1']
  %s0 = inlined_call_operand.hbm [shape: f32[16,10], index: 0, kind: input, shape index: {}]
  %s1 = inlined_call_operand.hbm [shape: bf16[10,128], index: 1, kind: input, shape index: {}]
  %s2 = inlined_call_operand.vmem [shape: bf16[1,128], index: 2, kind: input, shape index: {}]
  %s3 = inlined_call_operand.hbm [shape: bf16[128,128], index: 3, kind: input, shape index: {}]
  %s4 = inlined_call_operand.vmem [shape: bf16[1,128], index: 4, kind: input, shape index: {}]
  %s5 = inlined_call_operand.hbm [shape: bf16[128,128], index: 5, kind: input, shape index: {}]
  %s6 = inlined_call_operand.vmem [shape: bf16[1,128], index: 6, kind: input, shape index: {}]
  %s7 = inlined_call_operand.vmem [shape: f32[1,128], index: 7, kind: input, shape index: {}]
  %s8 = inlined_call_operand.<no memory space> [shape: f32[1,1], index: 8, kind: input, shape index: {}]
  %s9 = inlined_call_operand.vmem [shape: f32[16,1], index: 9, kind: output, shape index: {}]
  %s10 = sld [smem:[#allocation0]]
  $region62: #{tpu_custom_call.1} parent=0
    _
  %s12 = ssub.s32 1, %s10
  %s13 = scalar_select 0, %s12, %s10
  %v14 = vstv %s8
  %15 = vst [vmem:[#allocation2] sm:$0x1] %v14
  $region1: #{tpu_custom_call.1} parent=0
    #allocation3 [shape = 'u8[8192]{0}', space=vmem, size = 0x2000, scoped, tag = 'input window, operand 0, single buffered']
    #allocation4 [shape = 's32[1]{0}', space=sflag, size = 0x4, scoped, tag = 'scoped memory for tpu_custom_call.1']
    #allocation5 [shape = 'u8[4096]{0}', space=vmem, size = 0x1000, scoped, tag = 'input window, operand 1, single buffered']
    #allocation6 [shape = 's32[1]{0}', space=sflag, size = 0x4, scoped, tag = 'scoped memory for tpu_custom_call.1']
    #allocation7 [shape = 'u8[32768]{0}', space=vmem, size = 0x8000, scoped, tag = 'input window, operand 3, single buffered']
    #allocation8 [shape = 'u8[32768]{0}', space=vmem, size = 0x8000, scoped, tag = 'input window, operand 5, single buffered']
    #allocation9 [shape = 's32[1]{0}', space=sflag, size = 0x4, scoped, tag = 'scoped memory for tpu_custom_call.1']
    %16 = vsyncpa [#allocation4], 0
    %17 = vsyncpa [#allocation6], 0
    %18 = vsyncpa [#allocation9], 0
    // Predicated region
    $region2: #{tpu_custom_call.1} parent=1 // pred_check
      _
    $region3: #{tpu_custom_call.1} parent=1 // pred_check_branch
      %20 = sbr.rel (0) target = $region5
    $region4: #{tpu_custom_call.1} parent=1 // pred_region
      %s22 = ssub.s32 256, 256
      %23 = vsyncadd [#allocation4], %s22
      %s24 = sshll.u32 [#allocation3], 4
      %s25 = int_to_ptr.vmem [resolvable:$true] %s24
      %30 = dma.hbm_to_vmem [thread:$0]  %s0, 256, %s25, [#allocation4], 128, 128, 8
    $region5: #{tpu_custom_call.1} parent=1 // pred_fallthru
      _
    // Predicated region
    $region6: #{tpu_custom_call.1} parent=1 // pred_check
      _
    $region7: #{tpu_custom_call.1} parent=1 // pred_check_branch
      %32 = sbr.rel (0) target = $region9
    $region8: #{tpu_custom_call.1} parent=1 // pred_region
      %s34 = ssub.s32 128, 128
      %35 = vsyncadd [#allocation6], %s34
      %s36 = sshll.u32 [#allocation5], 4
      %s37 = int_to_ptr.vmem [resolvable:$true] %s36
      %42 = dma.hbm_to_vmem [thread:$0]  %s1, 128, %s37, [#allocation6], 64, 64, 4
    $region9: #{tpu_custom_call.1} parent=1 // pred_fallthru
      _
    // Predicated region
    $region10: #{tpu_custom_call.1} parent=1 // pred_check
      _
    $region11: #{tpu_custom_call.1} parent=1 // pred_check_branch
      %44 = sbr.rel (0) target = $region13
    $region12: #{tpu_custom_call.1} parent=1 // pred_region
      _
    $region13: #{tpu_custom_call.1} parent=1 // pred_fallthru
      _
    // Predicated region
    $region14: #{tpu_custom_call.1} parent=1 // pred_check
      _
    $region15: #{tpu_custom_call.1} parent=1 // pred_check_branch
      %46 = sbr.rel (0) target = $region17
    $region16: #{tpu_custom_call.1} parent=1 // pred_region
      %s48 = ssub.s32 1024, 1024
      %49 = vsyncadd [#allocation6], %s48
      %s50 = sshll.u32 [#allocation7], 4
      %s51 = int_to_ptr.vmem [resolvable:$true] %s50
      %56 = dma.hbm_to_vmem [thread:$0]  %s3, 1024, %s51, [#allocation6], 64, 64, 4
    $region17: #{tpu_custom_call.1} parent=1 // pred_fallthru
      _
    // Predicated region
    $region18: #{tpu_custom_call.1} parent=1 // pred_check
      _
    $region19: #{tpu_custom_call.1} parent=1 // pred_check_branch
      %58 = sbr.rel (0) target = $region21
    $region20: #{tpu_custom_call.1} parent=1 // pred_region
      _
    $region21: #{tpu_custom_call.1} parent=1 // pred_fallthru
      _
    // Predicated region
    $region22: #{tpu_custom_call.1} parent=1 // pred_check
      _
    $region23: #{tpu_custom_call.1} parent=1 // pred_check_branch
      %60 = sbr.rel (0) target = $region25
    $region24: #{tpu_custom_call.1} parent=1 // pred_region
      %s62 = ssub.s32 1024, 1024
      %63 = vsyncadd [#allocation9], %s62
      %s64 = sshll.u32 [#allocation8], 4
      %s65 = int_to_ptr.vmem [resolvable:$true] %s64
      %70 = dma.hbm_to_vmem [thread:$0]  %s5, 1024, %s65, [#allocation9], 64, 64, 4
    $region25: #{tpu_custom_call.1} parent=1 // pred_fallthru
      _
    // Predicated region
    $region26: #{tpu_custom_call.1} parent=1 // pred_check
      _
    $region27: #{tpu_custom_call.1} parent=1 // pred_check_branch
      %72 = sbr.rel (0) target = $region29
    $region28: #{tpu_custom_call.1} parent=1 // pred_region
      _
    $region29: #{tpu_custom_call.1} parent=1 // pred_fallthru
      _
    // Predicated region
    $region30: #{tpu_custom_call.1} parent=1 // pred_check
      _
    $region31: #{tpu_custom_call.1} parent=1 // pred_check_branch
      %74 = sbr.rel (0) target = $region33
    $region32: #{tpu_custom_call.1} parent=1 // pred_region
      _
    $region33: #{tpu_custom_call.1} parent=1 // pred_fallthru
      _
    // Predicated region
    $region34: #{tpu_custom_call.1} parent=1 // pred_check
      _
    $region35: #{tpu_custom_call.1} parent=1 // pred_check_branch
      %76 = sbr.rel (0) target = $region37
    $region36: #{tpu_custom_call.1} parent=1 // pred_region
      _
    $region37: #{tpu_custom_call.1} parent=1 // pred_fallthru
      _
    // Predicated region
    $region38: #{tpu_custom_call.1} parent=1 // pred_check
      _
    $region39: #{tpu_custom_call.1} parent=1 // pred_check_branch
      %78 = sbr.rel (0) target = $region41
    $region40: #{tpu_custom_call.1} parent=1 // pred_region
      %79 = dma.done [#allocation4], 256
    $region41: #{tpu_custom_call.1} parent=1 // pred_fallthru
      _
    // Predicated region
    $region42: #{tpu_custom_call.1} parent=1 // pred_check
      _
    $region43: #{tpu_custom_call.1} parent=1 // pred_check_branch
      %81 = sbr.rel (0) target = $region45
    $region44: #{tpu_custom_call.1} parent=1 // pred_region
      %82 = dma.done [#allocation6], 128
    $region45: #{tpu_custom_call.1} parent=1 // pred_fallthru
      _
    // Predicated region
    $region46: #{tpu_custom_call.1} parent=1 // pred_check
      _
    $region47: #{tpu_custom_call.1} parent=1 // pred_check_branch
      %84 = sbr.rel (0) target = $region49
    $region48: #{tpu_custom_call.1} parent=1 // pred_region
      %85 = dma.done [#allocation6], 1024
    $region49: #{tpu_custom_call.1} parent=1 // pred_fallthru
      _
    // Predicated region
    $region50: #{tpu_custom_call.1} parent=1 // pred_check
      _
    $region51: #{tpu_custom_call.1} parent=1 // pred_check_branch
      %87 = sbr.rel (0) target = $region53
    $region52: #{tpu_custom_call.1} parent=1 // pred_region
      %88 = dma.done [#allocation9], 1024
    $region53: #{tpu_custom_call.1} parent=1 // pred_fallthru
      _
    %v90 = vld [vmem:[#allocation3] sm:$0xff]
    %v91 = vld [vmem:[#allocation3 + $0x8] sm:$0xff]
    %v92 = vpack.c.bf16 %v91, %v90
    %v93 = vld [vmem:[#allocation5] sm:$0xf]
    %v94 = vld [vmem:[#allocation5 + $0x4] sm:$0x1]
    %v97 = vunpack.c.l.b16 %v93
    %v98 = vunpack.c.l.b16 %v94
    %v99 = vpack.c.b16 %v98, %v97
    %vm100 = vcmask 80896
    %v102 = vsel %vm100, %v92, 0
    %vm104 = vcmask 1044480
    %v106 = vsel %vm104, %v99, 0
    %108 = vmatprep.subr.bf16.mxu0 0
    %109 = vmatpush1.bf16.msra.mxu0 %v106
    %110 = vmatprep.subr.bf16.mxu0 0
    %111 = vmatpush1.bf16.msra.mxu0 0
    %112 = vmatprep.subr.bf16.mxu0 0
    %113 = vmatpush1.bf16.msra.mxu0 0
    %114 = vmatprep.subr.bf16.mxu0 0
    %115 = vmatpush1.bf16.msra.mxu0 0
    %116 = vmatprep.subr.bf16.mxu0 0
    %117 = vmatpush1.bf16.msra.mxu0 0
    %118 = vmatprep.subr.bf16.mxu0 0
    %119 = vmatpush1.bf16.msra.mxu0 0
    %120 = vmatprep.subr.bf16.mxu0 0
    %121 = vmatpush1.bf16.msra.mxu0 0
    %122 = vmatprep.subr.bf16.mxu0 0
    %123 = vmatpush1.bf16.msra.mxu0 0
    %124 = vmatprep.subr.bf16.mxu0 0
    %125 = vmatpush1.bf16.msra.mxu0 0
    %126 = vmatprep.subr.bf16.mxu0 0
    %127 = vmatpush1.bf16.msra.mxu0 0
    %128 = vmatprep.subr.bf16.mxu0 0
    %129 = vmatpush1.bf16.msra.mxu0 0
    %130 = vmatprep.subr.bf16.mxu0 0
    %131 = vmatpush1.bf16.msra.mxu0 0
    %132 = vmatprep.subr.bf16.mxu0 0
    %133 = vmatpush1.bf16.msra.mxu0 0
    %134 = vmatprep.subr.bf16.mxu0 0
    %135 = vmatpush1.bf16.msra.mxu0 0
    %136 = vmatprep.subr.bf16.mxu0 0
    %137 = vmatpush1.bf16.msra.mxu0 0
    %138 = vmatprep.subr.bf16.mxu0 0
    %139 = vmatpush1.bf16.msra.mxu0 0
    %140 = vmatprep.mubr.bf16.mxu0 0
    %141 = vmatmul.mubr.bf16.gmra.mrb[0].mxu0 %v102
    %v142 = vpop.f32.mrb[0].mxu0
    %v143 = vadd.f32 0.0, %v142
    %v144 = vpop.f32.mrb[0].mxu0
    %v145 = vpop.f32.mrb[0].mxu0
    %v146 = vadd.f32 0.0, %v145
    %v147 = vpop.f32.mrb[0].mxu0
    %148 = vdwg.mxu0
    %v149 = vpack.c.bf16 %v146, %v143
    %v150 = vld [vmem:[%s2] sm:$0x1]
    %v152 = vpack.i.b16 %v150, %v150
    %v154 = vlaneseq
    %v155 = vshrl.u32 %v154, 7
    %v156 = vsub.s32 0, %v155
    %v157 = vrot.slane %v152, %v156
    %v158 = vadd.bf16 %v149, %v157
    %v159 = vmax.bf16 %v158, 0
    %v160 = vld [vmem:[#allocation7] sm:$0xf]
    %v161 = vld [vmem:[#allocation7 + $0x4] sm:$0xf]
    %v162 = vld [vmem:[#allocation7 + $0x8] sm:$0xf]
    %v163 = vld [vmem:[#allocation7 + $0xc] sm:$0xf]
    %v164 = vld [vmem:[#allocation7 + $0x10] sm:$0xf]
    %v165 = vld [vmem:[#allocation7 + $0x14] sm:$0xf]
    %v166 = vld [vmem:[#allocation7 + $0x18] sm:$0xf]
    %v167 = vld [vmem:[#allocation7 + $0x1c] sm:$0xf]
    %v168 = vld [vmem:[#allocation7 + $0x20] sm:$0xf]
    %v169 = vld [vmem:[#allocation7 + $0x24] sm:$0xf]
    %v170 = vld [vmem:[#allocation7 + $0x28] sm:$0xf]
    %v171 = vld [vmem:[#allocation7 + $0x2c] sm:$0xf]
    %v172 = vld [vmem:[#allocation7 + $0x30] sm:$0xf]
    %v173 = vld [vmem:[#allocation7 + $0x34] sm:$0xf]
    %v174 = vld [vmem:[#allocation7 + $0x38] sm:$0xf]
    %v175 = vld [vmem:[#allocation7 + $0x3c] sm:$0xf]
    %v192 = vunpack.c.l.b16 %v160
    %v193 = vunpack.c.l.b16 %v161
    %v194 = vunpack.c.l.b16 %v162
    %v195 = vunpack.c.l.b16 %v163
    %v196 = vunpack.c.l.b16 %v164
    %v197 = vunpack.c.l.b16 %v165
    %v198 = vunpack.c.l.b16 %v166
    %v199 = vunpack.c.l.b16 %v167
    %v200 = vunpack.c.l.b16 %v168
    %v201 = vunpack.c.l.b16 %v169
    %v202 = vunpack.c.l.b16 %v170
    %v203 = vunpack.c.l.b16 %v171
    %v204 = vunpack.c.l.b16 %v172
    %v205 = vunpack.c.l.b16 %v173
    %v206 = vunpack.c.l.b16 %v174
    %v207 = vunpack.c.l.b16 %v175
    %v208 = vpack.c.b16 %v193, %v192
    %v209 = vpack.c.b16 %v195, %v194
    %v210 = vpack.c.b16 %v197, %v196
    %v211 = vpack.c.b16 %v199, %v198
    %v212 = vpack.c.b16 %v201, %v200
    %v213 = vpack.c.b16 %v203, %v202
    %v214 = vpack.c.b16 %v205, %v204
    %v215 = vpack.c.b16 %v207, %v206
    %224 = vmatprep.subr.bf16.mxu0 0
    %225 = vmatpush1.bf16.msra.mxu0 %v208
    %226 = vmatprep.subr.bf16.mxu0 0
    %227 = vmatpush1.bf16.msra.mxu0 %v209
    %228 = vmatprep.subr.bf16.mxu0 0
    %229 = vmatpush1.bf16.msra.mxu0 %v210
    %230 = vmatprep.subr.bf16.mxu0 0
    %231 = vmatpush1.bf16.msra.mxu0 %v211
    %232 = vmatprep.subr.bf16.mxu0 0
    %233 = vmatpush1.bf16.msra.mxu0 %v212
    %234 = vmatprep.subr.bf16.mxu0 0
    %235 = vmatpush1.bf16.msra.mxu0 %v213
    %236 = vmatprep.subr.bf16.mxu0 0
    %237 = vmatpush1.bf16.msra.mxu0 %v214
    %238 = vmatprep.subr.bf16.mxu0 0
    %239 = vmatpush1.bf16.msra.mxu0 %v215
    %240 = vmatprep.subr.bf16.mxu0 0
    %241 = vmatpush1.bf16.msra.mxu0 0
    %242 = vmatprep.subr.bf16.mxu0 0
    %243 = vmatpush1.bf16.msra.mxu0 0
    %244 = vmatprep.subr.bf16.mxu0 0
    %245 = vmatpush1.bf16.msra.mxu0 0
    %246 = vmatprep.subr.bf16.mxu0 0
    %247 = vmatpush1.bf16.msra.mxu0 0
    %248 = vmatprep.subr.bf16.mxu0 0
    %249 = vmatpush1.bf16.msra.mxu0 0
    %250 = vmatprep.subr.bf16.mxu0 0
    %251 = vmatpush1.bf16.msra.mxu0 0
    %252 = vmatprep.subr.bf16.mxu0 0
    %253 = vmatpush1.bf16.msra.mxu0 0
    %254 = vmatprep.subr.bf16.mxu0 0
    %255 = vmatpush1.bf16.msra.mxu0 0
    %256 = vmatprep.mubr.bf16.mxu0 0
    %257 = vmatmul.mubr.bf16.gmra.mrb[0].mxu0 %v159
    %v258 = vpop.f32.mrb[0].mxu0
    %v259 = vadd.f32 0.0, %v258
    %v260 = vpop.f32.mrb[0].mxu0
    %v261 = vpop.f32.mrb[0].mxu0
    %v262 = vadd.f32 0.0, %v261
    %v263 = vpop.f32.mrb[0].mxu0
    %264 = vdwg.mxu0
    %v265 = vpack.c.bf16 %v262, %v259
    %v266 = vld [vmem:[%s4] sm:$0x1]
    %v268 = vpack.i.b16 %v266, %v266
    %v270 = vlaneseq
    %v271 = vshrl.u32 %v270, 7
    %v272 = vsub.s32 0, %v271
    %v273 = vrot.slane %v268, %v272
    %v274 = vadd.bf16 %v265, %v273
    %v275 = vmax.bf16 %v274, 0
    %v276 = vld [vmem:[#allocation8] sm:$0xf]
    %v277 = vld [vmem:[#allocation8 + $0x4] sm:$0xf]
    %v278 = vld [vmem:[#allocation8 + $0x8] sm:$0xf]
    %v279 = vld [vmem:[#allocation8 + $0xc] sm:$0xf]
    %v280 = vld [vmem:[#allocation8 + $0x10] sm:$0xf]
    %v281 = vld [vmem:[#allocation8 + $0x14] sm:$0xf]
    %v282 = vld [vmem:[#allocation8 + $0x18] sm:$0xf]
    %v283 = vld [vmem:[#allocation8 + $0x1c] sm:$0xf]
    %v284 = vld [vmem:[#allocation8 + $0x20] sm:$0xf]
    %v285 = vld [vmem:[#allocation8 + $0x24] sm:$0xf]
    %v286 = vld [vmem:[#allocation8 + $0x28] sm:$0xf]
    %v287 = vld [vmem:[#allocation8 + $0x2c] sm:$0xf]
    %v288 = vld [vmem:[#allocation8 + $0x30] sm:$0xf]
    %v289 = vld [vmem:[#allocation8 + $0x34] sm:$0xf]
    %v290 = vld [vmem:[#allocation8 + $0x38] sm:$0xf]
    %v291 = vld [vmem:[#allocation8 + $0x3c] sm:$0xf]
    %v308 = vunpack.c.l.b16 %v276
    %v309 = vunpack.c.l.b16 %v277
    %v310 = vunpack.c.l.b16 %v278
    %v311 = vunpack.c.l.b16 %v279
    %v312 = vunpack.c.l.b16 %v280
    %v313 = vunpack.c.l.b16 %v281
    %v314 = vunpack.c.l.b16 %v282
    %v315 = vunpack.c.l.b16 %v283
    %v316 = vunpack.c.l.b16 %v284
    %v317 = vunpack.c.l.b16 %v285
    %v318 = vunpack.c.l.b16 %v286
    %v319 = vunpack.c.l.b16 %v287
    %v320 = vunpack.c.l.b16 %v288
    %v321 = vunpack.c.l.b16 %v289
    %v322 = vunpack.c.l.b16 %v290
    %v323 = vunpack.c.l.b16 %v291
    %v324 = vpack.c.b16 %v309, %v308
    %v325 = vpack.c.b16 %v311, %v310
    %v326 = vpack.c.b16 %v313, %v312
    %v327 = vpack.c.b16 %v315, %v314
    %v328 = vpack.c.b16 %v317, %v316
    %v329 = vpack.c.b16 %v319, %v318
    %v330 = vpack.c.b16 %v321, %v320
    %v331 = vpack.c.b16 %v323, %v322
    %340 = vmatprep.subr.bf16.mxu0 0
    %341 = vmatpush1.bf16.msra.mxu0 %v324
    %342 = vmatprep.subr.bf16.mxu0 0
    %343 = vmatpush1.bf16.msra.mxu0 %v325
    %344 = vmatprep.subr.bf16.mxu0 0
    %345 = vmatpush1.bf16.msra.mxu0 %v326
    %346 = vmatprep.subr.bf16.mxu0 0
    %347 = vmatpush1.bf16.msra.mxu0 %v327
    %348 = vmatprep.subr.bf16.mxu0 0
    %349 = vmatpush1.bf16.msra.mxu0 %v328
    %350 = vmatprep.subr.bf16.mxu0 0
    %351 = vmatpush1.bf16.msra.mxu0 %v329
    %352 = vmatprep.subr.bf16.mxu0 0
    %353 = vmatpush1.bf16.msra.mxu0 %v330
    %354 = vmatprep.subr.bf16.mxu0 0
    %355 = vmatpush1.bf16.msra.mxu0 %v331
    %356 = vmatprep.subr.bf16.mxu0 0
    %357 = vmatpush1.bf16.msra.mxu0 0
    %358 = vmatprep.subr.bf16.mxu0 0
    %359 = vmatpush1.bf16.msra.mxu0 0
    %360 = vmatprep.subr.bf16.mxu0 0
    %361 = vmatpush1.bf16.msra.mxu0 0
    %362 = vmatprep.subr.bf16.mxu0 0
    %363 = vmatpush1.bf16.msra.mxu0 0
    %364 = vmatprep.subr.bf16.mxu0 0
    %365 = vmatpush1.bf16.msra.mxu0 0
    %366 = vmatprep.subr.bf16.mxu0 0
    %367 = vmatpush1.bf16.msra.mxu0 0
    %368 = vmatprep.subr.bf16.mxu0 0
    %369 = vmatpush1.bf16.msra.mxu0 0
    %370 = vmatprep.subr.bf16.mxu0 0
    %371 = vmatpush1.bf16.msra.mxu0 0
    %372 = vmatprep.mubr.bf16.mxu0 0
    %373 = vmatmul.mubr.bf16.gmra.mrb[0].mxu0 %v275
    %v374 = vpop.f32.mrb[0].mxu0
    %v375 = vadd.f32 0.0, %v374
    %v376 = vpop.f32.mrb[0].mxu0
    %v377 = vpop.f32.mrb[0].mxu0
    %v378 = vadd.f32 0.0, %v377
    %v379 = vpop.f32.mrb[0].mxu0
    %380 = vdwg.mxu0
    %v381 = vpack.c.bf16 %v378, %v375
    %v382 = vld [vmem:[%s6] sm:$0x1]
    %v384 = vpack.i.b16 %v382, %v382
    %v386 = vlaneseq
    %v387 = vshrl.u32 %v386, 7
    %v388 = vsub.s32 0, %v387
    %v389 = vrot.slane %v384, %v388
    %v390 = vadd.bf16 %v381, %v389
    %v391 = vmax.bf16 %v390, 0
    %v392 = vunpack.c.l.bf16 %v391
    %v393 = vunpack.c.h.bf16 %v391
    %v394 = vld [vmem:[%s7] sm:$0x1]
    %v396 = vlaneseq
    %v397 = vshrl.u32 %v396, 7
    %v398 = vsub.s32 0, %v397
    %v399 = vrot.slane %v394, %v398
    %v401 = vmul.f32 %v392, %v399
    %v402 = vmul.f32 %v393, %v399
    %403 = vadd.xlane.f32.xlu0 %v401
    %v404 = vpop.xlane.xlu0 %403
    %405 = vadd.xlane.f32.xlu0 %v402
    %v406 = vpop.xlane.xlu0 %405
    %v407 = vld [vmem:[#allocation2] sm:$0x1]
    %v409 = vlaneseq
    %v410 = vshrl.u32 %v409, 7
    %v411 = vsub.s32 0, %v410
    %v412 = vrot.slane %v407, %v411
    %v414 = vadd.f32 %v404, %v412
    %v415 = vadd.f32 %v406, %v412
    %vm416 = vcmask 7168
    %417 = vst.msk [vmem:[%s9] sm:$0xff] %vm416, %v414
    %418 = vst.msk [vmem:[%s9 + $0x8] sm:$0xff] %vm416, %v415
    // Predicated region
    $region54: #{tpu_custom_call.1} parent=1 // pred_check
      _
    $region55: #{tpu_custom_call.1} parent=1 // pred_check_branch
      %420 = sbr.rel (0) target = $region57
    $region56: #{tpu_custom_call.1} parent=1 // pred_region
      _
    $region57: #{tpu_custom_call.1} parent=1 // pred_fallthru
      _
    // Predicated region
    $region58: #{tpu_custom_call.1} parent=1 // pred_check
      _
    $region59: #{tpu_custom_call.1} parent=1 // pred_check_branch
      %422 = sbr.rel (0) target = $region61
    $region60: #{tpu_custom_call.1} parent=1 // pred_region
      _
    $region61: #{tpu_custom_call.1} parent=1 // pred_fallthru
      _
    %423 = vsyncpa [#allocation4], 1
    %424 = vsyncpa [#allocation6], 1
    %425 = vsyncpa [#allocation9], 1

</llo_original>
